<compile_context>
chip_gen: v7x
topology: tpu7x:2x2x1
jax: 0.10.0
libtpu: 0.0.40
codegen_flags: <defaults>
</compile_context>

<pallas_src>
import functools

import jax
import jax.numpy as jnp
from jax.experimental import pallas as pl
from jax.experimental.pallas import tpu as pltpu


def _gumbel_sigmoid_train_kernel(x_ref, u_ref, o_ref, *, scale, eps):
    x = x_ref[...].astype(jnp.float32)
    u = u_ref[...].astype(jnp.float32)
    # Gumbel noise: -log(-log(U + eps) + eps).  eps keeps log finite when the
    # uniform sample is exactly 0 (matches the PyTorch reference).
    g = -jnp.log(-jnp.log(u + eps) + eps)
    z = scale * (x + g)
    # sigmoid(z) == 0.5 * (tanh(0.5*z) + 1): 1 EUP op instead of exp+recip.
    o_ref[...] = (0.5 * (jnp.tanh(0.5 * z) + 1.0)).astype(o_ref.dtype)


def _gumbel_sigmoid_eval_kernel(x_ref, o_ref, *, scale):
    x = x_ref[...].astype(jnp.float32)
    z = scale * x
    o_ref[...] = (0.5 * (jnp.tanh(0.5 * z) + 1.0)).astype(o_ref.dtype)


def _choose_width(n):
    """Widest lane-dense width (multiple of 128) that divides n; else pad to 128."""
    for w in (1024, 512, 256, 128):
        if n % w == 0:
            return w, 0
    return 128, (-n) % 128


def _choose_block_rows(rows, width):
    """~1 MiB f32 per block buffer, rows multiple of 8 (or the full extent)."""
    target_elems = 256 * 1024  # 1 MiB of f32
    br = max(8, (target_elems // width) // 8 * 8)
    return rows if rows <= br else br


def gumbel_sigmoid(logits, seed, *, scale=1.0, training=True, eps=1e-20):
    """Pallas implementation of GumbelSigmoid.forward.

    logits: any-shaped float array (e.g. NCHW conv activations).
    seed:   python int or int32/uint32 scalar (jit-traceable) for the noise.
    """
    orig_shape = logits.shape
    orig_dtype = logits.dtype
    itemsize = jnp.dtype(orig_dtype).itemsize

    flat = logits.reshape(-1)
    n = flat.shape[0]
    width, pad = _choose_width(n)
    if pad:
        flat = jnp.pad(flat, (0, pad))
    rows = flat.shape[0] // width
    x2d = flat.reshape(rows, width)

    block_rows = _choose_block_rows(rows, width)
    grid = (pl.cdiv(rows, block_rows),)
    blk = pl.BlockSpec((block_rows, width), lambda i: (i, 0))
    n_eff = rows * width

    compiler_params = pltpu.CompilerParams(
        dimension_semantics=("parallel",),
    )

    if training:
        key = jax.random.PRNGKey(seed)
        u2d = jax.random.uniform(key, (rows, width), dtype=jnp.float32)

        kernel = functools.partial(
            _gumbel_sigmoid_train_kernel, scale=float(scale), eps=float(eps)
        )
        cost = pl.CostEstimate(
            flops=6 * n_eff,
            transcendentals=3 * n_eff,  # log, log, tanh per element
            bytes_accessed=n_eff * (itemsize + 4 + itemsize),
        )
        out2d = pl.pallas_call(
            kernel,
            out_shape=jax.ShapeDtypeStruct((rows, width), orig_dtype),
            grid=grid,
            in_specs=[blk, blk],
            out_specs=blk,
            compiler_params=compiler_params,
            cost_estimate=cost,
        )(x2d, u2d)
    else:
        kernel = functools.partial(_gumbel_sigmoid_eval_kernel, scale=float(scale))
        cost = pl.CostEstimate(
            flops=3 * n_eff,
            transcendentals=n_eff,  # tanh per element
            bytes_accessed=2 * n_eff * itemsize,
        )
        out2d = pl.pallas_call(
            kernel,
            out_shape=jax.ShapeDtypeStruct((rows, width), orig_dtype),
            grid=grid,
            in_specs=[blk],
            out_specs=blk,
            compiler_params=compiler_params,
            cost_estimate=cost,
        )(x2d)

    out_flat = out2d.reshape(-1)
    if pad:
        out_flat = out_flat[:n]
    return out_flat.reshape(orig_shape)


if __name__ == "__main__":
    key = jax.random.PRNGKey(0)
    k_x, k_seed = jax.random.split(key)

    # Small NCHW logits tensor (as out of a conv): batch=2, C=4, H=W=16
    x = jax.random.normal(k_x, (2, 4, 16, 16), dtype=jnp.float32)
    seed = int(jax.random.randint(k_seed, (), 0, 2**31 - 1))

    scale = 1.0

    # Eval-mode forward (deterministic) — verify against plain JAX reference.
    out_eval = gumbel_sigmoid(x, seed, scale=scale, training=False)
    out_eval = jax.block_until_ready(out_eval)
    ref_eval = jax.nn.sigmoid(scale * x)
    assert jnp.allclose(out_eval, ref_eval, atol=1e-5, rtol=1e-5), "eval-mode mismatch"

    # Training-mode forward (stochastic Gumbel noise).
    out_train = gumbel_sigmoid(x, seed, scale=scale, training=True)
    out_train = jax.block_until_ready(out_train)
    assert out_train.shape == x.shape
    assert bool(jnp.all(jnp.isfinite(out_train)))
    assert bool(jnp.all((out_train >= 0.0) & (out_train <= 1.0)))
    # Noise should actually perturb the output relative to eval mode.
    assert not bool(jnp.allclose(out_train, ref_eval, atol=1e-3))

    print("KERNEL_OK")
</pallas_src>

<mosaic_0001>
module attributes {stable_mosaic.version = 11 : i64} {
  func.func @_gumbel_sigmoid_eval_kernel(%arg0: i32, %arg1: memref<2x1024xf32, #tpu.memory_space<vmem>>, %arg2: memref<2x1024xf32, #tpu.memory_space<vmem>>) attributes {dimension_semantics = [#tpu.dimension_semantics<parallel>], iteration_bounds = array<i64: 1>, scalar_prefetch = 0 : i64, scratch_operands = 0 : i64, tpu.core_type = #tpu.core_type<tc>, window_params = [{transform_indices = @transform_0, window_bounds = array<i64: 2, 1024>}, {transform_indices = @transform_1, window_bounds = array<i64: 2, 1024>}]} {
    %c0 = arith.constant 0 : index
    %c0_0 = arith.constant 0 : index
    %0 = vector.load %arg1[%c0, %c0_0] : memref<2x1024xf32, #tpu.memory_space<vmem>>, vector<2x1024xf32>
    %cst = arith.constant 1.000000e+00 : f32
    %1 = vector.broadcast %cst : f32 to vector<2x1024xf32>
    %2 = arith.mulf %1, %0 : vector<2x1024xf32>
    %cst_1 = arith.constant 5.000000e-01 : f32
    %3 = vector.broadcast %cst_1 : f32 to vector<2x1024xf32>
    %4 = arith.mulf %3, %2 : vector<2x1024xf32>
    %5 = math.tanh %4 : vector<2x1024xf32>
    %cst_2 = arith.constant 1.000000e+00 : f32
    %6 = vector.broadcast %cst_2 : f32 to vector<2x1024xf32>
    %7 = arith.addf %5, %6 : vector<2x1024xf32>
    %cst_3 = arith.constant 5.000000e-01 : f32
    %8 = vector.broadcast %cst_3 : f32 to vector<2x1024xf32>
    %9 = arith.mulf %8, %7 : vector<2x1024xf32>
    %c0_4 = arith.constant 0 : index
    %c0_5 = arith.constant 0 : index
    %10 = vector.load %arg2[%c0_4, %c0_5] : memref<2x1024xf32, #tpu.memory_space<vmem>>, vector<2x1024xf32>
    tpu.vector_store %arg2[%c0_4, %c0_5], %9 {strides = array<i32>} : memref<2x1024xf32, #tpu.memory_space<vmem>>, vector<2x1024xf32>,
    return
  }
  func.func @transform_0(%arg0: i32) -> (i32, i32) {
    %c0_i32 = arith.constant 0 : i32
    %c0_i32_0 = arith.constant 0 : i32
    return %arg0, %c0_i32 : i32, i32
  }
  func.func @transform_1(%arg0: i32) -> (i32, i32) {
    %c0_i32 = arith.constant 0 : i32
    %c0_i32_0 = arith.constant 0 : i32
    return %arg0, %c0_i32 : i32, i32
  }
}

</mosaic_0001>

<llo_original>
// kernel: tpu_custom_call.1
$region0: #{tpu_custom_call.1}
  #allocation0 [shape = 'u32[]', space=smem, size = 0x4, offset = 0x4, fixed_abs, tag = 'smem constant byte address 0x4 - core index']
  #allocation1 [shape = 'u32[144,128]{1,0:T(1,128)}', space=vmem, size = 0x12000, scoped, tag = 'internal scratch']
  %s0 = inlined_call_operand.hbm [shape: f32[2,1024], index: 0, kind: input, shape index: {}]
  %s1 = inlined_call_operand.hbm [shape: f32[2,1024], index: 1, kind: output, shape index: {}]
  %s2 = sld [smem:[#allocation0]]
  $region18: #{tpu_custom_call.1} parent=0
    _
  %s4 = ssub.s32 1, %s2
  %s5 = scalar_select 0, %s4, %s2
  $region1: #{tpu_custom_call.1} parent=0
    #allocation2 [shape = 'u8[8192]{0}', space=vmem, size = 0x2000, scoped, tag = 'input window, operand 0, single buffered']
    #allocation3 [shape = 's32[1]{0}', space=sflag, size = 0x4, scoped, tag = 'scoped memory for tpu_custom_call.1']
    #allocation4 [shape = 's32[1]{0}', space=sflag, size = 0x4, scoped, tag = 'scoped memory for tpu_custom_call.1']
    #allocation5 [shape = 'u8[8192]{0}', space=vmem, size = 0x2000, scoped, tag = 'output window, operand 0, single buffered']
    %6 = vsyncpa [#allocation3], 0
    %7 = vsyncpa [#allocation4], 0
    // Predicated region
    $region2: #{tpu_custom_call.1} parent=1 // pred_check
      _
    $region3: #{tpu_custom_call.1} parent=1 // pred_check_branch
      %9 = sbr.rel (0) target = $region5
    $region4: #{tpu_custom_call.1} parent=1 // pred_region
      %s11 = ssub.s32 256, 256
      %12 = vsyncadd [#allocation3], %s11
      %s14 = sshll.u32 [#allocation2], 4
      %s15 = int_to_ptr.vmem [resolvable:$true] %s14
      %17 = dma.hbm_to_vmem [thread:$0]  %s0, 256, %s15, [#allocation3]
    $region5: #{tpu_custom_call.1} parent=1 // pred_fallthru
      _
    // Predicated region
    $region6: #{tpu_custom_call.1} parent=1 // pred_check
      _
    $region7: #{tpu_custom_call.1} parent=1 // pred_check_branch
      %19 = sbr.rel (0) target = $region9
    $region8: #{tpu_custom_call.1} parent=1 // pred_region
      %20 = dma.done [#allocation3], 256
    $region9: #{tpu_custom_call.1} parent=1 // pred_fallthru
      _
    %v21 = vld [vmem:[#allocation2] sm:$0xff]
    %v22 = vld [vmem:[#allocation2 + $0x8] sm:$0xff]
    %v23 = vmul.f32 %v21, 0.5
    %v24 = vmul.f32 %v22, 0.5
    %v25 = vtanh.pop %v23
    %v26 = vtanh.pop %v24
    %v27 = vadd.f32 %v25, 1.0
    %v28 = vadd.f32 %v26, 1.0
    %v29 = vmul.f32 %v27, 0.5
    %v30 = vmul.f32 %v28, 0.5
    %31 = vst [vmem:[#allocation5] sm:$0xff] %v29
    %32 = vst [vmem:[#allocation5 + $0x8] sm:$0xff] %v30
    // Predicated region
    $region10: #{tpu_custom_call.1} parent=1 // pred_check
      _
    $region11: #{tpu_custom_call.1} parent=1 // pred_check_branch
      %34 = sbr.rel (0) target = $region13
    $region12: #{tpu_custom_call.1} parent=1 // pred_region
      %s36 = ssub.s32 256, 256
      %37 = vsyncadd [#allocation4], %s36
      %s39 = sshll.u32 [#allocation5], 4
      %s40 = int_to_ptr.vmem [resolvable:$true] %s39
      %42 = dma.vmem_to_hbm [thread:$0]  %s40, 256, %s1, [#allocation4]
    $region13: #{tpu_custom_call.1} parent=1 // pred_fallthru
      _
    // Predicated region
    $region14: #{tpu_custom_call.1} parent=1 // pred_check
      _
    $region15: #{tpu_custom_call.1} parent=1 // pred_check_branch
      %44 = sbr.rel (0) target = $region17
    $region16: #{tpu_custom_call.1} parent=1 // pred_region
      %45 = dma.done [#allocation4], 256
    $region17: #{tpu_custom_call.1} parent=1 // pred_fallthru
      _
    %46 = vsyncpa [#allocation3], 1
    %47 = vsyncpa [#allocation4], 1

</llo_original>
